<compile_context>
chip_gen: v6e
topology: v6e:2x2x1
jax: 0.10.0
libtpu: 0.0.40
codegen_flags: <defaults>
</compile_context>

<pallas_src>
import functools
import math

import numpy as np
import jax
import jax.numpy as jnp
from jax import lax
from jax.experimental import pallas as pl
from jax.experimental.pallas import tpu as pltpu

LANE = 128
NEG_LOGIT = -1e30                  # bias of padded class columns -> exp() underflows to 0
_VMEM_FLOOR = 32 * 1024 * 1024
_VMEM_CAP = 56 * 1024 * 1024       # keep under v7x's 64 MiB physical VMEM


def _round_up(a, b):
    return ((a + b - 1) // b) * b


def _row_tile(rows, cap=256):
    """Largest multiple-of-8 divisor of `rows` <= cap; prefer >=2 grid steps when rows
    allow it so the 'parallel' row axis can shard across both v7x TensorCores."""
    divs = [t for t in range(8, rows + 1, 8) if rows % t == 0]
    tiles = [t for t in divs if t <= cap] or divs[:1]
    tm = max(tiles)
    if tm == rows and rows >= 16:
        halves = [t for t in tiles if t <= rows // 2]
        if halves:
            tm = max(halves)
    return tm


def _pick_tk(d, cap=2048):
    """Reduction-axis tile for the classifier matmul: a divisor of d (no ragged K blocks
    ever feed the accumulator); full d when it is already small."""
    if d <= cap:
        return d
    for tk in (2048, 1024, 512, 256, 128):
        if d % tk == 0:
            return tk
    return d


def _vmem_limit(est_bytes):
    return int(min(max(2 * est_bytes, _VMEM_FLOOR), _VMEM_CAP))


# --- single-buffering of grid-invariant operands (capability probed once) ------------
_BUFFERED1_OK = None


def _buffered1_supported():
    global _BUFFERED1_OK
    if _BUFFERED1_OK is None:
        try:
            def _k(x_ref, o_ref):
                o_ref[...] = x_ref[...] + 1.0
            spec = pl.BlockSpec((8, LANE), lambda i: (0, 0),
                                pipeline_mode=pl.Buffered(1))
            out = pl.pallas_call(
                _k,
                grid=(1,),
                in_specs=[spec],
                out_specs=pl.BlockSpec((8, LANE), lambda i: (0, 0)),
                out_shape=jax.ShapeDtypeStruct((8, LANE), jnp.float32),
            )(jnp.zeros((8, LANE), jnp.float32))
            jax.block_until_ready(out)
            _BUFFERED1_OK = True
        except Exception:
            _BUFFERED1_OK = False
    return _BUFFERED1_OK


def _resident_spec(block_shape, index_map):
    """BlockSpec for a grid-invariant operand: single-buffered when supported."""
    if _buffered1_supported():
        return pl.BlockSpec(block_shape, index_map, pipeline_mode=pl.Buffered(1))
    return pl.BlockSpec(block_shape, index_map)


# ----------------------------------------------------------------------------
# Kernel 1: classifier forward + softmax + entropy + analytic entropy-gradient.
# Grid = (row tiles [parallel], D tiles [arbitrary, accumulated in f32 scratch]).
# ----------------------------------------------------------------------------
def _fwd_entropy_grad_kernel(x_ref, w_ref, b_ref,
                             logits_ref, probs_ref, grad_ref, ent_ref,
                             acc_ref):
    k = pl.program_id(1)

    @pl.when(k == 0)
    def _():
        acc_ref[...] = jnp.zeros_like(acc_ref)

    # f32 x tile cast to bf16 in-VMEM right before the MXU (no extra XLA cast pass).
    acc_ref[...] += jnp.dot(x_ref[...].astype(jnp.bfloat16), w_ref[...],
                            preferred_element_type=jnp.float32)

    @pl.when(k == pl.num_programs(1) - 1)
    def _():
        logits = acc_ref[...] + b_ref[...]
        logits_ref[...] = logits
        z = logits - jnp.max(logits, axis=-1, keepdims=True)
        logs = jnp.log(jnp.sum(jnp.exp(z), axis=-1, keepdims=True))
        logp = z - logs
        p = jnp.exp(logp)            # exact + consistent with logp (threshold-mask parity)
        probs_ref[...] = p
        ent = -jnp.sum(p * logp, axis=-1, keepdims=True)
        grad_ref[...] = (-p * (logp + ent)).astype(grad_ref.dtype)   # bf16 writeback
        ent_ref[...] = jnp.broadcast_to(ent, ent_ref.shape)          # lane-dense store


@jax.jit
def _classifier_forward(x_flat, w_p, b_p):
    n, d = x_flat.shape
    kp = w_p.shape[1]
    rows = _round_up(n, 8)
    if rows != n:
        x_flat = jnp.pad(x_flat, ((0, rows - n), (0, 0)))
    tm = _row_tile(rows)
    tk = _pick_tk(d)
    w_bufs = 1 if (d == tk and _buffered1_supported()) else 2
    est = (2 * tm * tk * 4 + w_bufs * tk * kp * 2 + 2 * kp * 4
           + 2 * 2 * tm * kp * 4 + 2 * tm * kp * 2 + 2 * tm * LANE * 4
           + tm * kp * 4)
    w_index = lambda i, k: (k, 0)
    w_spec = (_resident_spec((tk, kp), w_index) if d == tk
              else pl.BlockSpec((tk, kp), w_index))
    logits, probs, grads, ent = pl.pallas_call(
        _fwd_entropy_grad_kernel,
        grid_spec=pltpu.PrefetchScalarGridSpec(
            num_scalar_prefetch=0,
            grid=(rows // tm, d // tk),
            in_specs=[
                pl.BlockSpec((tm, tk), lambda i, k: (i, k)),
                w_spec,
                pl.BlockSpec((1, kp), lambda i, k: (0, 0)),
            ],
            out_specs=[
                pl.BlockSpec((tm, kp), lambda i, k: (i, 0)),
                pl.BlockSpec((tm, kp), lambda i, k: (i, 0)),
                pl.BlockSpec((tm, kp), lambda i, k: (i, 0)),
                pl.BlockSpec((tm, LANE), lambda i, k: (i, 0)),
            ],
            scratch_shapes=[pltpu.VMEM((tm, kp), jnp.float32)],
        ),
        out_shape=(
            jax.ShapeDtypeStruct((rows, kp), jnp.float32),    # logits (padded classes)
            jax.ShapeDtypeStruct((rows, kp), jnp.float32),    # probs  (padded cols == 0)
            jax.ShapeDtypeStruct((rows, kp), jnp.bfloat16),   # d(entropy)/d(logits)
            jax.ShapeDtypeStruct((rows, LANE), jnp.float32),  # entropy (lane broadcast)
        ),
        compiler_params=pltpu.CompilerParams(
            dimension_semantics=("parallel", "arbitrary"),
            vmem_limit_bytes=_vmem_limit(est)),
    )(x_flat, w_p, b_p)
    return logits[:n], probs[:n], ent[:n, 0], grads[:n]


# ----------------------------------------------------------------------------
# Kernel 2: cosine distances vs. a fixed-size, pre-normalized, transposed bf16 bank.
#           D = 1 - normalize(Q) @ bank_nT ; invalid bank slots -> -1e30
# ----------------------------------------------------------------------------
def _cosine_dist_kernel(nvalid_ref, q_ref, bank_nT_ref, d_ref):
    q = q_ref[...].astype(jnp.float32)
    inv = lax.rsqrt(jnp.maximum(jnp.sum(q * q, axis=-1, keepdims=True), 1e-24))
    qn = (q * inv).astype(jnp.bfloat16)               # bf16 MXU operand, f32 accumulate
    sim = jnp.dot(qn, bank_nT_ref[...], preferred_element_type=jnp.float32)
    lane = lax.broadcasted_iota(jnp.int32, sim.shape, 1)
    d_ref[...] = jnp.where(lane < nvalid_ref[0], 1.0 - sim, -1e30)


@jax.jit
def _cosine_distances(query, bank_nT, nvalid):
    n, f = query.shape
    qp = bank_nT.shape[1]
    rows = _round_up(n, 8)
    if rows != n:
        query = jnp.pad(query, ((0, rows - n), (0, 0)))
    tq = _row_tile(rows)
    bank_bufs = 1 if _buffered1_supported() else 2
    est = (2 * tq * f * query.dtype.itemsize + bank_bufs * f * qp * 2 + 2 * tq * qp * 4)
    dists = pl.pallas_call(
        _cosine_dist_kernel,
        grid_spec=pltpu.PrefetchScalarGridSpec(
            num_scalar_prefetch=1,
            grid=(rows // tq,),
            in_specs=[
                pl.BlockSpec((tq, f), lambda i, nv: (i, 0)),
                _resident_spec((f, qp), lambda i, nv: (0, 0)),
            ],
            out_specs=pl.BlockSpec((tq, qp), lambda i, nv: (i, 0)),
        ),
        out_shape=jax.ShapeDtypeStruct((rows, qp), jnp.float32),
        compiler_params=pltpu.CompilerParams(
            dimension_semantics=("parallel",),
            vmem_limit_bytes=_vmem_limit(est)),
    )(nvalid, query, bank_nT)
    return dists[:n]


# ----------------------------------------------------------------------------
# Kernel 3: fused  x_mix = alpha*x + (1-alpha)*img -> logits2 = x_mix @ W + b
#           -> per-row KL(log_softmax(logits2) || probs_mix), gridded over row tiles.
#           Lane-dense per-row partial sums; final reduction + 1/N (batchmean) in XLA.
# ----------------------------------------------------------------------------
def _mix_kl_kernel(x_ref, img_ref, pmix_ref, w_ref, b_ref, kl_ref, *, alpha):
    xm = x_ref[...] * alpha + img_ref[...] * (1.0 - alpha)        # f32
    logits = jnp.dot(xm.astype(jnp.bfloat16), w_ref[...],
                     preferred_element_type=jnp.float32) + b_ref[...]
    z = logits - jnp.max(logits, axis=-1, keepdims=True)
    logq = z - jnp.log(jnp.sum(jnp.exp(z), axis=-1, keepdims=True))
    p = pmix_ref[...]
    terms = jnp.where(p > 0, p * (jnp.log(jnp.maximum(p, 1e-38)) - logq), 0.0)
    per_row = jnp.sum(terms, axis=-1, keepdims=True)              # (tm, 1)
    kl_ref[...] = jnp.broadcast_to(per_row, kl_ref.shape)         # lane-dense (tm, 128)


@functools.partial(jax.jit, static_argnames=("alpha",))
def _mix_forward_kl(x_flat, img_flat, probs, probs_nn, w_p, b_p, alpha):
    n, d = x_flat.shape
    kp = w_p.shape[1]
    probs_mix = probs * alpha + probs_nn * (1.0 - alpha)
    rows = _round_up(n, 8)
    if rows != n:
        pad = ((0, rows - n), (0, 0))
        x_flat = jnp.pad(x_flat, pad)
        img_flat = jnp.pad(img_flat, pad)
        probs_mix = jnp.pad(probs_mix, pad)        # zero rows -> exactly 0 KL contribution
    tm = _row_tile(rows)
    w_bufs = 1 if _buffered1_supported() else 2
    # TODO(synk): for very large D the resident W block here should also be K-tiled.
    est = (2 * 2 * tm * d * 4 + 2 * tm * kp * 4 + w_bufs * d * kp * 2
           + 2 * kp * 4 + 2 * tm * LANE * 4)
    per_row = pl.pallas_call(
        functools.partial(_mix_kl_kernel, alpha=float(alpha)),
        grid=(rows // tm,),
        in_specs=[
            pl.BlockSpec((tm, d), lambda i: (i, 0)),
            pl.BlockSpec((tm, d), lambda i: (i, 0)),
            pl.BlockSpec((tm, kp), lambda i: (i, 0)),
            _resident_spec((d, kp), lambda i: (0, 0)),
            pl.BlockSpec((1, kp), lambda i: (0, 0)),
        ],
        out_specs=pl.BlockSpec((tm, LANE), lambda i: (i, 0)),
        out_shape=jax.ShapeDtypeStruct((rows, LANE), jnp.float32),
        compiler_params=pltpu.CompilerParams(
            dimension_semantics=("parallel",),
            vmem_limit_bytes=_vmem_limit(est)),
    )(x_flat, img_flat, probs_mix, w_p, b_p)
    return jnp.sum(per_row[:, 0]) / n              # batchmean KL


# ----------------------------------------------------------------------------
# Jitted glue (filters, masked means, bank scatter, kNN aggregate, masked loss)
# ----------------------------------------------------------------------------
@jax.jit
def _filter_no_cmp(probs, entropys, e_margin):
    mask1 = entropys < e_margin
    n1 = jnp.sum(mask1)
    mean1 = jnp.sum(probs * mask1[:, None], axis=0) / jnp.maximum(n1, 1).astype(probs.dtype)
    return mask1, n1, mean1


@jax.jit
def _filter_with_cmp(probs, entropys, cmp_vec, e_margin, d_margin):
    mask1 = entropys < e_margin
    num = probs @ cmp_vec
    den = (jnp.maximum(jnp.linalg.norm(cmp_vec), 1e-8)
           * jnp.maximum(jnp.linalg.norm(probs, axis=1), 1e-8))
    cos = num / den
    mask13 = mask1 & (jnp.abs(cos) < d_margin)
    n1 = jnp.sum(mask1)
    n13 = jnp.sum(mask13)
    mean13 = (jnp.sum(probs * mask13[:, None], axis=0)
              / jnp.maximum(n13, 1).astype(probs.dtype))
    return mask1, mask13, n1, n13, mean13


@functools.partial(jax.jit, static_argnames=("queue_size",))
def _bank_scatter(features, probs_bank, image_bank, x, feats, probs, sel_mask, ptr,
                  queue_size):
    qp = features.shape[0]
    ranks = jnp.cumsum(sel_mask.astype(jnp.int32)) - 1
    slots = jnp.where(sel_mask, (ptr + ranks) % queue_size, qp)       # unselected -> dropped
    features = features.at[slots].set(feats.astype(jnp.float32), mode="drop")
    probs_bank = probs_bank.at[slots].set(probs.astype(jnp.float32), mode="drop")
    image_bank = image_bank.at[slots].set(x.astype(jnp.float32), mode="drop")
    # normalization + transpose hoisted here (query-invariant); stored bf16 for the MXU.
    ssq = jnp.sum(features * features, axis=1, keepdims=True)
    feat_nT = (features * lax.rsqrt(jnp.maximum(ssq, 1e-24))).T.astype(jnp.bfloat16)
    return features, probs_bank, image_bank, feat_nT


@functools.partial(jax.jit, static_argnames=("k",))
def _knn_aggregate(dists, feats_bank, probs_bank, img_bank, k):
    _, idxs = lax.top_k(dists, k)                   # reference: largest cosine distance
    grads = jnp.take(feats_bank, idxs, axis=0).mean(axis=1)
    pred_probs = jnp.take(probs_bank, idxs, axis=0).mean(axis=1)
    pred_images = jnp.take(img_bank, idxs, axis=0).mean(axis=1)
    pred_labels = jnp.argmax(pred_probs, axis=1)
    return pred_labels, pred_probs, pred_images, grads


@jax.jit
def _masked_entropy_mean(entropys, sel_mask):
    m = sel_mask.astype(entropys.dtype)
    return jnp.sum(entropys * m) / jnp.maximum(jnp.sum(m), 1.0)


# ----------------------------------------------------------------------------
# Host-side stateful pieces (glue), mirroring the PyTorch module
# ----------------------------------------------------------------------------
def update_model_probs(current, new_mean, count):
    if current is None:
        return new_mean if count > 0 else None
    if count == 0:
        return current
    return 0.9 * current + 0.1 * new_mean


class FeatureBank:
    """Fixed-shape (lane-dense) on-device memory bank; unwritten / stale slots are masked
    inside the cosine kernel via a scalar-prefetched validity count (one compile, ever)."""

    def __init__(self, queue_size, neighbor=1):
        self.queue_size = queue_size if queue_size > 0 else 64
        self.qp = _round_up(self.queue_size, LANE)
        self.features = None          # (qp, KP) f32 entropy-gradients
        self.probs = None             # (qp, KP) f32
        self.image_bank = None        # (qp, C, H, W) f32
        self.feat_nT = None           # (KP, qp) bf16, normalized + transposed
        self.ptr = 0
        self.num_neighbors = neighbor
        self.num_features_stored = 0

    def update(self, x, feats, probs, sel_mask, count):
        # NOTE: mirrors reference quirk -> bank is re-zeroed on every update if queue_size == 64
        if (self.features is None or self.probs is None) or self.queue_size == 64:
            self.features = jnp.zeros((self.qp, feats.shape[1]), jnp.float32)
            self.probs = jnp.zeros((self.qp, probs.shape[1]), jnp.float32)
            self.image_bank = jnp.zeros((self.qp,) + tuple(x.shape[1:]), jnp.float32)
            self.feat_nT = jnp.zeros((feats.shape[1], self.qp), jnp.bfloat16)
        if count > 0:
            self.features, self.probs, self.image_bank, self.feat_nT = _bank_scatter(
                self.features, self.probs, self.image_bank,
                x, feats, probs, sel_mask, self.ptr, queue_size=self.queue_size)
        self.ptr = (self.ptr + count) % self.queue_size
        self.num_features_stored += count

    def soft_k_nearest_neighbors(self, features):
        nvalid_count = min(self.num_features_stored, self.queue_size)
        nvalid = jnp.asarray([nvalid_count], jnp.int32)
        dists = _cosine_distances(features, self.feat_nT, nvalid)
        k = max(1, min(self.num_neighbors, nvalid_count))   # never top_k past valid slots
        return _knn_aggregate(dists, self.features, self.probs, self.image_bank, k)

    def refine_predictions(self, features):
        return self.soft_k_nearest_neighbors(features)


class CPL:
    """JAX/Pallas re-implementation of the CPL test-time-adaptation forward pass.

    Wrapped 'model' is a deterministic linear classifier logits = flatten(x) @ W + b.
    Class dim is zero-padded to 128 lanes (bias padded with -1e30 -> padded classes get
    exactly zero probability); results are sliced back to the true class count."""

    def __init__(self, w, b, d_margin=0.05, loss2_weight=3, queue_size=32, neighbor=1):
        _buffered1_supported()        # resolve Buffered(1) capability outside any trace
        w = jnp.asarray(w, jnp.float32)
        b = jnp.asarray(b, jnp.float32).reshape(-1)
        d_in, k = w.shape
        self.num_classes = k
        self.kp = max(LANE, _round_up(k, LANE))
        w_pad = jnp.zeros((d_in, self.kp), jnp.float32).at[:, :k].set(w)
        self.w_p = w_pad.astype(jnp.bfloat16)                 # bf16 MXU operand
        self.b_p = jnp.full((1, self.kp), NEG_LOGIT, jnp.float32).at[0, :k].set(b)
        self.steps = 1
        self.episodic = False
        a = 0.4
        self.e_margin = math.log(1000) * a
        self.d_margin = d_margin
        self.current_model_probs = None                       # padded (kp,), pads are 0
        self.batch_counter = 0
        self.memory_bank = FeatureBank(queue_size, neighbor)
        self.alpha = 1.0 / (neighbor + 1)
        self.loss2_weight = loss2_weight
        self.num_samples_update_1 = 0
        self.num_samples_update_2 = 0
        # TODO(synk): init_mb() needs a val_loader + external gererate_partialY /
        # InstanceSelector; select_ids is set deterministically to "all ids" instead.
        self.select_ids = set(range(1000))

    def model(self, x):
        n = x.shape[0]
        return _classifier_forward(x.reshape(n, -1), self.w_p, self.b_p)

    def forward(self, ids, x):
        outputs = None
        for _ in range(self.steps):
            outputs, n2, n1 = self.forward_and_adapt_eata(ids, x)
            self.num_samples_update_2 += n2
            self.num_samples_update_1 += n1
        return outputs

    def forward_and_adapt_eata(self, ids, x):
        n = x.shape[0]
        x = jnp.asarray(x, jnp.float32)
        x_flat = x.reshape(n, -1)
        logits, probs, entropys, grads = _classifier_forward(x_flat, self.w_p, self.b_p)
        # TODO(synk): gererate_partialY / PLL_loss are external and their outputs are
        # unused downstream in the reference forward; not implemented here.

        if self.current_model_probs is not None:
            mask1, mask13, n1_d, n13_d, mean13 = _filter_with_cmp(
                probs, entropys, self.current_model_probs, self.e_margin, self.d_margin)
            # single tiny device->host sync (counts drive python control flow / bank ptr)
            n1, n13 = (int(v) for v in jax.device_get((n1_d, n13_d)))
            self.current_model_probs = update_model_probs(
                self.current_model_probs, mean13 if n13 > 0 else None, n13)
            if self.memory_bank.queue_size > 0:
                if n13 > 0:
                    self.memory_bank.update(x, grads, probs, mask13, n13)
                else:
                    self.memory_bank.update(x, grads, probs, mask1, n1)
            num_counts_2 = n13
        else:
            mask1, n1_d, mean1 = _filter_no_cmp(probs, entropys, self.e_margin)
            n1 = int(jax.device_get(n1_d))
            self.current_model_probs = update_model_probs(
                self.current_model_probs, mean1 if n1 > 0 else None, n1)
            num_counts_2 = n1

        loss2 = None
        if self.memory_bank.num_features_stored > 0:
            _, probs_nn, img, _ = self.memory_bank.refine_predictions(grads)
            loss2 = _mix_forward_kl(x_flat, img.reshape(n, -1), probs, probs_nn,
                                    self.w_p, self.b_p,
                                    float(self.alpha)) * self.loss2_weight

        ids_np = np.asarray(ids)                               # ids are host metadata
        selected_mask = np.array([int(i) in self.select_ids for i in ids_np])
        loss = None
        if selected_mask.any():
            loss = _masked_entropy_mean(entropys, jnp.asarray(selected_mask))
        if loss is not None and loss2 is not None:
            loss = loss + loss2
        # TODO(synk): loss.backward() + optimizer.step() omitted — no optimizer /
        # trainable state in this synthetic kernel; loss is computed for parity only.
        _ = loss
        self.batch_counter += 1
        outputs = logits[:, :self.num_classes]
        return outputs, num_counts_2, 0


# ----------------------------------------------------------------------------
if __name__ == "__main__":
    key = jax.random.PRNGKey(0)
    N, C, H, W = 4, 4, 16, 16
    # 8 classes -> max entropy log(8)=2.08 < e_margin=2.76, so the entropy filter keeps
    # samples and the adaptation / memory-bank / KL path is exercised.
    K = 8
    D = C * H * W

    k1, k2, k3, k4 = jax.random.split(key, 4)
    x1 = jax.random.normal(k1, (N, C, H, W), jnp.float32)      # layout: NCHW
    x2 = jax.random.normal(k2, (N, C, H, W), jnp.float32)
    w = jax.random.normal(k3, (D, K), jnp.float32) / jnp.sqrt(D)
    b = jax.random.normal(k4, (K,), jnp.float32) * 0.01

    cpl = CPL(w, b, queue_size=32, neighbor=1)

    ids1 = np.arange(N)
    ids2 = np.arange(N, 2 * N)

    out1 = cpl.forward(ids1, x1)   # 1st call: classifier/entropy/grad kernel, sets model probs
    out2 = cpl.forward(ids2, x2)   # 2nd call: bank update + cosine-kNN kernel + gridded mix-KL

    jax.block_until_ready(out1)
    jax.block_until_ready(out2)
    assert out1.shape == (N, K) and out2.shape == (N, K)
    assert jnp.all(jnp.isfinite(out1)) and jnp.all(jnp.isfinite(out2))
    print("KERNEL_OK")
</pallas_src>

<mosaic_0001>
module attributes {stable_mosaic.version = 11 : i64} {
  func.func @_k(%arg0: i32, %arg1: memref<8x128xf32, #tpu.memory_space<vmem>>, %arg2: memref<8x128xf32, #tpu.memory_space<vmem>>) attributes {dimension_semantics = [#tpu.dimension_semantics<arbitrary>], iteration_bounds = array<i64: 1>, scalar_prefetch = 0 : i64, scratch_operands = 0 : i64, tpu.core_type = #tpu.core_type<tc>, window_params = [{pipeline_mode = #tpu.pipeline_mode<synchronous>, transform_indices = @transform_0, window_bounds = array<i64: 8, 128>}, {pipeline_mode = #tpu.pipeline_mode<synchronous>, transform_indices = @transform_1, window_bounds = array<i64: 8, 128>}]} {
    %c0 = arith.constant 0 : index
    %c0_0 = arith.constant 0 : index
    %0 = vector.load %arg1[%c0, %c0_0] : memref<8x128xf32, #tpu.memory_space<vmem>>, vector<8x128xf32>
    %cst = arith.constant 1.000000e+00 : f32
    %1 = vector.broadcast %cst : f32 to vector<8x128xf32>
    %2 = arith.addf %0, %1 : vector<8x128xf32>
    %c0_1 = arith.constant 0 : index
    %c0_2 = arith.constant 0 : index
    %3 = vector.load %arg2[%c0_1, %c0_2] : memref<8x128xf32, #tpu.memory_space<vmem>>, vector<8x128xf32>
    tpu.vector_store %arg2[%c0_1, %c0_2], %2 {strides = array<i32>} : memref<8x128xf32, #tpu.memory_space<vmem>>, vector<8x128xf32>,
    return
  }
  func.func @transform_0(%arg0: i32) -> (i32, i32) {
    %c0_i32 = arith.constant 0 : i32
    %c0_i32_0 = arith.constant 0 : i32
    %c0_i32_1 = arith.constant 0 : i32
    return %c0_i32, %c0_i32_0 : i32, i32
  }
  func.func @transform_1(%arg0: i32) -> (i32, i32) {
    %c0_i32 = arith.constant 0 : i32
    %c0_i32_0 = arith.constant 0 : i32
    %c0_i32_1 = arith.constant 0 : i32
    return %c0_i32, %c0_i32_0 : i32, i32
  }
}

module attributes {stable_mosaic.version = 11 : i64} {
  func.func @_fwd_entropy_grad_kernel(%arg0: i32, %arg1: i32, %arg2: memref<8x1024xf32, #tpu.memory_space<vmem>>, %arg3: memref<1024x128xbf16, #tpu.memory_space<vmem>>, %arg4: memref<1x128xf32, #tpu.memory_space<vmem>>, %arg5: memref<8x128xf32, #tpu.memory_space<vmem>>, %arg6: memref<8x128xf32, #tpu.memory_space<vmem>>, %arg7: memref<8x128xbf16, #tpu.memory_space<vmem>>, %arg8: memref<8x128xf32, #tpu.memory_space<vmem>>, %arg9: memref<8x128xf32, #tpu.memory_space<vmem>>) attributes {dimension_semantics = [#tpu.dimension_semantics<parallel>, #tpu.dimension_semantics<arbitrary>], iteration_bounds = array<i64: 1, 1>, scalar_prefetch = 0 : i64, scratch_operands = 1 : i64, tpu.core_type = #tpu.core_type<tc>, window_params = [{transform_indices = @transform_0, window_bounds = array<i64: 8, 1024>}, {transform_indices = @transform_1, window_bounds = array<i64: 1024, 128>}, {pipeline_mode = #tpu.pipeline_mode<synchronous>, transform_indices = @transform_2, window_bounds = array<i64: 1, 128>}, {transform_indices = @transform_3, window_bounds = array<i64: 8, 128>}, {transform_indices = @transform_4, window_bounds = array<i64: 8, 128>}, {transform_indices = @transform_5, window_bounds = array<i64: 8, 128>}, {transform_indices = @transform_6, window_bounds = array<i64: 8, 128>}]} {
    %c0_i32 = arith.constant 0 : i32
    %0 = arith.cmpi eq, %arg1, %c0_i32 : i32
    %1 = arith.extui %0 : i1 to i32
    %c0_i32_0 = arith.constant 0 : i32
    %2 = arith.cmpi ne, %1, %c0_i32_0 : i32
    scf.if %2 {
      %cst_10 = arith.constant 0.000000e+00 : f32
      %13 = vector.broadcast %cst_10 : f32 to vector<8x128xf32>
      %c0_11 = arith.constant 0 : index
      %c0_12 = arith.constant 0 : index
      %14 = vector.load %arg9[%c0_11, %c0_12] : memref<8x128xf32, #tpu.memory_space<vmem>>, vector<8x128xf32>
      tpu.vector_store %arg9[%c0_11, %c0_12], %13 {strides = array<i32>} : memref<8x128xf32, #tpu.memory_space<vmem>>, vector<8x128xf32>,
    } else {
    }
    %c0 = arith.constant 0 : index
    %c0_1 = arith.constant 0 : index
    %3 = vector.load %arg9[%c0, %c0_1] : memref<8x128xf32, #tpu.memory_space<vmem>>, vector<8x128xf32>
    %c0_2 = arith.constant 0 : index
    %c0_3 = arith.constant 0 : index
    %4 = vector.load %arg2[%c0_2, %c0_3] : memref<8x1024xf32, #tpu.memory_space<vmem>>, vector<8x1024xf32>
    %5 = arith.truncf %4 : vector<8x1024xf32> to vector<8x1024xbf16>
    %c0_4 = arith.constant 0 : index
    %c0_5 = arith.constant 0 : index
    %6 = vector.load %arg3[%c0_4, %c0_5] : memref<1024x128xbf16, #tpu.memory_space<vmem>>, vector<1024x128xbf16>
    %cst = arith.constant dense<0.000000e+00> : vector<8x128xf32>
    %7 = tpu.matmul %5, %6, %cst {dimension_numbers = #tpu.dot_dimension_numbers<[1], [0], [0], [1], [0, 0, 1, 1], [], []>} : vector<8x1024xbf16>, vector<1024x128xbf16>, vector<8x128xf32> -> vector<8x128xf32>
    %8 = arith.addf %3, %7 : vector<8x128xf32>
    %c0_6 = arith.constant 0 : index
    %c0_7 = arith.constant 0 : index
    %9 = vector.load %arg9[%c0_6, %c0_7] : memref<8x128xf32, #tpu.memory_space<vmem>>, vector<8x128xf32>
    tpu.vector_store %arg9[%c0_6, %c0_7], %8 {strides = array<i32>} : memref<8x128xf32, #tpu.memory_space<vmem>>, vector<8x128xf32>,
    %c0_i32_8 = arith.constant 0 : i32
    %10 = arith.cmpi eq, %arg1, %c0_i32_8 : i32
    %11 = arith.extui %10 : i1 to i32
    %c0_i32_9 = arith.constant 0 : i32
    %12 = arith.cmpi ne, %11, %c0_i32_9 : i32
    scf.if %12 {
      %c0_10 = arith.constant 0 : index
      %c0_11 = arith.constant 0 : index
      %13 = vector.load %arg9[%c0_10, %c0_11] : memref<8x128xf32, #tpu.memory_space<vmem>>, vector<8x128xf32>
      %c0_12 = arith.constant 0 : index
      %c0_13 = arith.constant 0 : index
      %14 = vector.load %arg4[%c0_12, %c0_13] : memref<1x128xf32, #tpu.memory_space<vmem>>, vector<1x128xf32>
      %15 = vector.broadcast %14 : vector<1x128xf32> to vector<8x128xf32>
      %16 = arith.addf %13, %15 : vector<8x128xf32>
      %c0_14 = arith.constant 0 : index
      %c0_15 = arith.constant 0 : index
      %17 = vector.load %arg5[%c0_14, %c0_15] : memref<8x128xf32, #tpu.memory_space<vmem>>, vector<8x128xf32>
      tpu.vector_store %arg5[%c0_14, %c0_15], %16 {strides = array<i32>} : memref<8x128xf32, #tpu.memory_space<vmem>>, vector<8x128xf32>,
      %cst_16 = arith.constant dense<0xFF800000> : vector<8xf32>
      %18 = vector.multi_reduction <maximumf>, %16, %cst_16 [1] : vector<8x128xf32> to vector<8xf32>
      %19 = vector.shape_cast %18 : vector<8xf32> to vector<8x1xf32>
      %20 = vector.broadcast %19 : vector<8x1xf32> to vector<8x128xf32>
      %21 = arith.subf %16, %20 : vector<8x128xf32>
      %22 = math.exp %21 : vector<8x128xf32>
      %cst_17 = arith.constant dense<0.000000e+00> : vector<8xf32>
      %23 = vector.multi_reduction <add>, %22, %cst_17 [1] : vector<8x128xf32> to vector<8xf32>
      %24 = vector.shape_cast %23 : vector<8xf32> to vector<8x1xf32>
      %25 = math.log %24 : vector<8x1xf32>
      %26 = vector.broadcast %25 : vector<8x1xf32> to vector<8x128xf32>
      %27 = arith.subf %21, %26 : vector<8x128xf32>
      %28 = math.exp %27 : vector<8x128xf32>
      %c0_18 = arith.constant 0 : index
      %c0_19 = arith.constant 0 : index
      %29 = vector.load %arg6[%c0_18, %c0_19] : memref<8x128xf32, #tpu.memory_space<vmem>>, vector<8x128xf32>
      tpu.vector_store %arg6[%c0_18, %c0_19], %28 {strides = array<i32>} : memref<8x128xf32, #tpu.memory_space<vmem>>, vector<8x128xf32>,
      %30 = arith.mulf %28, %27 : vector<8x128xf32>
      %cst_20 = arith.constant dense<0.000000e+00> : vector<8xf32>
      %31 = vector.multi_reduction <add>, %30, %cst_20 [1] : vector<8x128xf32> to vector<8xf32>
      %32 = vector.shape_cast %31 : vector<8xf32> to vector<8x1xf32>
      %cst_21 = arith.constant 0.000000e+00 : f32
      %33 = vector.broadcast %cst_21 : f32 to vector<8x1xf32>
      %34 = arith.subf %33, %32 : vector<8x1xf32>
      %cst_22 = arith.constant 0.000000e+00 : f32
      %35 = vector.broadcast %cst_22 : f32 to vector<8x128xf32>
      %36 = arith.subf %35, %28 : vector<8x128xf32>
      %37 = vector.broadcast %34 : vector<8x1xf32> to vector<8x128xf32>
      %38 = arith.addf %27, %37 : vector<8x128xf32>
      %39 = arith.mulf %36, %38 : vector<8x128xf32>
      %40 = arith.truncf %39 : vector<8x128xf32> to vector<8x128xbf16>
      %c0_23 = arith.constant 0 : index
      %c0_24 = arith.constant 0 : index
      %41 = vector.load %arg7[%c0_23, %c0_24] : memref<8x128xbf16, #tpu.memory_space<vmem>>, vector<8x128xbf16>
      tpu.vector_store %arg7[%c0_23, %c0_24], %40 {strides = array<i32>} : memref<8x128xbf16, #tpu.memory_space<vmem>>, vector<8x128xbf16>,
      %42 = vector.shape_cast %34 : vector<8x1xf32> to vector<8x1xf32>
      %43 = vector.broadcast %42 : vector<8x1xf32> to vector<8x128xf32>
      %c0_25 = arith.constant 0 : index
      %c0_26 = arith.constant 0 : index
      %44 = vector.load %arg8[%c0_25, %c0_26] : memref<8x128xf32, #tpu.memory_space<vmem>>, vector<8x128xf32>
      tpu.vector_store %arg8[%c0_25, %c0_26], %43 {strides = array<i32>} : memref<8x128xf32, #tpu.memory_space<vmem>>, vector<8x128xf32>,
    } else {
    }
    return
  }
  func.func @transform_0(%arg0: i32, %arg1: i32) -> (i32, i32) {
    %c0_i32 = arith.constant 0 : i32
    return %arg0, %arg1 : i32, i32
  }
  func.func @transform_1(%arg0: i32, %arg1: i32) -> (i32, i32) {
    %c0_i32 = arith.constant 0 : i32
    %c0_i32_0 = arith.constant 0 : i32
    return %arg1, %c0_i32 : i32, i32
  }
  func.func @transform_2(%arg0: i32, %arg1: i32) -> (i32, i32) {
    %c0_i32 = arith.constant 0 : i32
    %c0_i32_0 = arith.constant 0 : i32
    %c0_i32_1 = arith.constant 0 : i32
    return %c0_i32, %c0_i32_0 : i32, i32
  }
  func.func @transform_3(%arg0: i32, %arg1: i32) -> (i32, i32) {
    %c0_i32 = arith.constant 0 : i32
    %c0_i32_0 = arith.constant 0 : i32
    return %arg0, %c0_i32 : i32, i32
  }
  func.func @transform_4(%arg0: i32, %arg1: i32) -> (i32, i32) {
    %c0_i32 = arith.constant 0 : i32
    %c0_i32_0 = arith.constant 0 : i32
    return %arg0, %c0_i32 : i32, i32
  }
  func.func @transform_5(%arg0: i32, %arg1: i32) -> (i32, i32) {
    %c0_i32 = arith.constant 0 : i32
    %c0_i32_0 = arith.constant 0 : i32
    return %arg0, %c0_i32 : i32, i32
  }
  func.func @transform_6(%arg0: i32, %arg1: i32) -> (i32, i32) {
    %c0_i32 = arith.constant 0 : i32
    %c0_i32_0 = arith.constant 0 : i32
    return %arg0, %c0_i32 : i32, i32
  }
}

</mosaic_0001>

<llo_original>
// kernel: tpu_custom_call.1
$region0: #{tpu_custom_call.1}
  #allocation0 [shape = 'u32[]', space=smem, size = 0x4, offset = 0x4, fixed_abs, tag = 'smem constant byte address 0x4 - core index']
  #allocation1 [shape = 'u32[144,128]{1,0:T(1,128)}', space=vmem, size = 0x12000, scoped, tag = 'internal scratch']
  %s0 = inlined_call_operand.hbm [shape: f32[8,128], index: 0, kind: input, shape index: {}]
  %s1 = inlined_call_operand.hbm [shape: f32[8,128], index: 1, kind: output, shape index: {}]
  %s2 = sld [smem:[#allocation0]]
  $region18: #{tpu_custom_call.1} parent=0
    _
  %s4 = ssub.s32 1, %s2
  %s5 = scalar_select 0, %s4, %s2
  $region1: #{tpu_custom_call.1} parent=0
    #allocation2 [shape = 'u8[4096]{0}', space=vmem, size = 0x1000, scoped, tag = 'input window, operand 0, single buffered']
    #allocation3 [shape = 's32[1]{0}', space=sflag, size = 0x4, scoped, tag = 'scoped memory for tpu_custom_call.1']
    #allocation4 [shape = 's32[1]{0}', space=sflag, size = 0x4, scoped, tag = 'scoped memory for tpu_custom_call.1']
    #allocation5 [shape = 'u8[4096]{0}', space=vmem, size = 0x1000, scoped, tag = 'output window, operand 0, single buffered']
    %6 = vsyncpa [#allocation3], 0
    %7 = vsyncpa [#allocation4], 0
    // Predicated region
    $region2: #{tpu_custom_call.1} parent=1 // pred_check
      _
    $region3: #{tpu_custom_call.1} parent=1 // pred_check_branch
      %9 = sbr.rel (0) target = $region5
    $region4: #{tpu_custom_call.1} parent=1 // pred_region
      %s11 = ssub.s32 128, 128
      %12 = vsyncadd [#allocation3], %s11
      %s14 = sshll.u32 [#allocation2], 4
      %s15 = int_to_ptr.vmem [resolvable:$true] %s14
      %17 = dma.hbm_to_vmem [thread:$0]  %s0, 128, %s15, [#allocation3]
    $region5: #{tpu_custom_call.1} parent=1 // pred_fallthru
      _
    // Predicated region
    $region6: #{tpu_custom_call.1} parent=1 // pred_check
      _
    $region7: #{tpu_custom_call.1} parent=1 // pred_check_branch
      %19 = sbr.rel (0) target = $region9
    $region8: #{tpu_custom_call.1} parent=1 // pred_region
      %20 = dma.done [#allocation3], 128
    $region9: #{tpu_custom_call.1} parent=1 // pred_fallthru
      _
    %v21 = vld [vmem:[#allocation2] sm:$0xff]
    %v22 = vadd.f32 %v21, 1.0
    %23 = vst [vmem:[#allocation5] sm:$0xff] %v22
    // Predicated region
    $region10: #{tpu_custom_call.1} parent=1 // pred_check
      _
    $region11: #{tpu_custom_call.1} parent=1 // pred_check_branch
      %25 = sbr.rel (0) target = $region13
    $region12: #{tpu_custom_call.1} parent=1 // pred_region
      %s27 = ssub.s32 128, 128
      %28 = vsyncadd [#allocation4], %s27
      %s30 = sshll.u32 [#allocation5], 4
      %s31 = int_to_ptr.vmem [resolvable:$true] %s30
      %33 = dma.vmem_to_hbm [thread:$0]  %s31, 128, %s1, [#allocation4]
    $region13: #{tpu_custom_call.1} parent=1 // pred_fallthru
      _
    // Predicated region
    $region14: #{tpu_custom_call.1} parent=1 // pred_check
      _
    $region15: #{tpu_custom_call.1} parent=1 // pred_check_branch
      %35 = sbr.rel (0) target = $region17
    $region16: #{tpu_custom_call.1} parent=1 // pred_region
      %36 = dma.done [#allocation4], 128
    $region17: #{tpu_custom_call.1} parent=1 // pred_fallthru
      _
    %37 = vsyncpa [#allocation3], 1
    %38 = vsyncpa [#allocation4], 1

// kernel: _classifier_forward.1
$region0: #{_classifier_forward.1}
  #allocation0 [shape = 'u32[]', space=smem, size = 0x4, offset = 0x4, fixed_abs, tag = 'smem constant byte address 0x4 - core index']
  #allocation1 [shape = 'u32[144,128]{1,0:T(1,128)}', space=vmem, size = 0x12000, scoped, tag = 'internal scratch']
  #allocation2 [shape = 'f32[8,128]{1,0:T(8,128)}', space=vmem, size = 0x1000, scoped, tag = 'scratch operand']
  %s0 = inlined_call_operand.vmem [shape: f32[8,1024], index: 0, kind: input, shape index: {}]
  %s1 = inlined_call_operand.hbm [shape: bf16[1024,128], index: 1, kind: input, shape index: {}]
  %s2 = inlined_call_operand.vmem [shape: f32[1,128], index: 2, kind: input, shape index: {}]
  %s3 = inlined_call_operand.vmem [shape: f32[8,128], index: 3, kind: output, shape index: {0}]
  %s4 = inlined_call_operand.vmem [shape: f32[8,128], index: 4, kind: output, shape index: {1}]
  %s5 = inlined_call_operand.vmem [shape: bf16[8,128], index: 5, kind: output, shape index: {2}]
  %s6 = inlined_call_operand.vmem [shape: f32[8,128], index: 6, kind: output, shape index: {3}]
  %7 = xla_tuple %s3, %s4, %s5, %s6
  %s8 = sld [smem:[#allocation0]]
  $region58: #{_classifier_forward.1} parent=0
    _
  %s10 = ssub.s32 1, %s8
  %s11 = scalar_select 0, %s10, %s8
  $region1: #{_classifier_forward.1} parent=0
    #allocation3 [shape = 'u8[262144]{0}', space=vmem, size = 0x40000, scoped, tag = 'input window, operand 1, single buffered']
    #allocation4 [shape = 's32[1]{0}', space=sflag, size = 0x4, scoped, tag = 'scoped memory for _classifier_forward.1']
    %12 = vsyncpa [#allocation4], 0
    // Predicated region
    $region2: #{_classifier_forward.1} parent=1 // pred_check
      _
    $region3: #{_classifier_forward.1} parent=1 // pred_check_branch
      %14 = sbr.rel (0) target = $region5
    $region4: #{_classifier_forward.1} parent=1 // pred_region
      _
    $region5: #{_classifier_forward.1} parent=1 // pred_fallthru
      _
    // Predicated region
    $region6: #{_classifier_forward.1} parent=1 // pred_check
      _
    $region7: #{_classifier_forward.1} parent=1 // pred_check_branch
      %16 = sbr.rel (0) target = $region9
    $region8: #{_classifier_forward.1} parent=1 // pred_region
      %s18 = ssub.s32 8192, 8192
      %19 = vsyncadd [#allocation4], %s18
      %s20 = sshll.u32 [#allocation3], 4
      %s21 = int_to_ptr.vmem [resolvable:$true] %s20
      %26 = dma.hbm_to_vmem [thread:$0]  %s1, 8192, %s21, [#allocation4], 64, 64, 4
    $region9: #{_classifier_forward.1} parent=1 // pred_fallthru
      _
    // Predicated region
    $region10: #{_classifier_forward.1} parent=1 // pred_check
      _
    $region11: #{_classifier_forward.1} parent=1 // pred_check_branch
      %28 = sbr.rel (0) target = $region13
    $region12: #{_classifier_forward.1} parent=1 // pred_region
      _
    $region13: #{_classifier_forward.1} parent=1 // pred_fallthru
      _
    // Predicated region
    $region14: #{_classifier_forward.1} parent=1 // pred_check
      _
    $region15: #{_classifier_forward.1} parent=1 // pred_check_branch
      %30 = sbr.rel (0) target = $region17
    $region16: #{_classifier_forward.1} parent=1 // pred_region
      %31 = dma.done [#allocation4], 8192
    $region17: #{_classifier_forward.1} parent=1 // pred_fallthru
      _
    %p33 = scmp.eq.s32.totalorder 0, 0
    // Predicated region
    $region18: #{_classifier_forward.1} parent=1 // pred_check
      %p34 = pneg %p33
    $region19: #{_classifier_forward.1} parent=1 // pred_check_branch
      %36 = sbr.rel (%p34) target = $region21
    $region20: #{_classifier_forward.1} parent=1 // pred_region
      %37 = vst [vmem:[#allocation2] sm:$0xff] 0.0
    $region21: #{_classifier_forward.1} parent=1 // pred_fallthru
      _
    %v38 = vld [vmem:[#allocation2] sm:$0xff]
    %v39 = vld [vmem:[%s0] sm:$0xff]
    %v40 = vld [vmem:[%s0 + $0x8] sm:$0xff]
    %v41 = vld [vmem:[%s0 + $0x10] sm:$0xff]
    %v42 = vld [vmem:[%s0 + $0x18] sm:$0xff]
    %v43 = vld [vmem:[%s0 + $0x20] sm:$0xff]
    %v44 = vld [vmem:[%s0 + $0x28] sm:$0xff]
    %v45 = vld [vmem:[%s0 + $0x30] sm:$0xff]
    %v46 = vld [vmem:[%s0 + $0x38] sm:$0xff]
    %v47 = vpack.c.bf16 %v39, %v39
    %v48 = vpack.c.bf16 %v40, %v40
    %v49 = vpack.c.bf16 %v41, %v41
    %v50 = vpack.c.bf16 %v42, %v42
    %v51 = vpack.c.bf16 %v43, %v43
    %v52 = vpack.c.bf16 %v44, %v44
    %v53 = vpack.c.bf16 %v45, %v45
    %v54 = vpack.c.bf16 %v46, %v46
    %v55 = vld [vmem:[#allocation3] sm:$0xf]
    %v56 = vld [vmem:[#allocation3 + $0x4] sm:$0xf]
    %v57 = vld [vmem:[#allocation3 + $0x8] sm:$0xf]
    %v58 = vld [vmem:[#allocation3 + $0xc] sm:$0xf]
    %v59 = vld [vmem:[#allocation3 + $0x10] sm:$0xf]
    %v60 = vld [vmem:[#allocation3 + $0x14] sm:$0xf]
    %v61 = vld [vmem:[#allocation3 + $0x18] sm:$0xf]
    %v62 = vld [vmem:[#allocation3 + $0x1c] sm:$0xf]
    %v63 = vld [vmem:[#allocation3 + $0x20] sm:$0xf]
    %v64 = vld [vmem:[#allocation3 + $0x24] sm:$0xf]
    %v65 = vld [vmem:[#allocation3 + $0x28] sm:$0xf]
    %v66 = vld [vmem:[#allocation3 + $0x2c] sm:$0xf]
    %v67 = vld [vmem:[#allocation3 + $0x30] sm:$0xf]
    %v68 = vld [vmem:[#allocation3 + $0x34] sm:$0xf]
    %v69 = vld [vmem:[#allocation3 + $0x38] sm:$0xf]
    %v70 = vld [vmem:[#allocation3 + $0x3c] sm:$0xf]
    %v71 = vld [vmem:[#allocation3 + $0x40] sm:$0xf]
    %v72 = vld [vmem:[#allocation3 + $0x44] sm:$0xf]
    %v73 = vld [vmem:[#allocation3 + $0x48] sm:$0xf]
    %v74 = vld [vmem:[#allocation3 + $0x4c] sm:$0xf]
    %v75 = vld [vmem:[#allocation3 + $0x50] sm:$0xf]
    %v76 = vld [vmem:[#allocation3 + $0x54] sm:$0xf]
    %v77 = vld [vmem:[#allocation3 + $0x58] sm:$0xf]
    %v78 = vld [vmem:[#allocation3 + $0x5c] sm:$0xf]
    %v79 = vld [vmem:[#allocation3 + $0x60] sm:$0xf]
    %v80 = vld [vmem:[#allocation3 + $0x64] sm:$0xf]
    %v81 = vld [vmem:[#allocation3 + $0x68] sm:$0xf]
    %v82 = vld [vmem:[#allocation3 + $0x6c] sm:$0xf]
    %v83 = vld [vmem:[#allocation3 + $0x70] sm:$0xf]
    %v84 = vld [vmem:[#allocation3 + $0x74] sm:$0xf]
    %v85 = vld [vmem:[#allocation3 + $0x78] sm:$0xf]
    %v86 = vld [vmem:[#allocation3 + $0x7c] sm:$0xf]
    %v87 = vld [vmem:[#allocation3 + $0x80] sm:$0xf]
    %v88 = vld [vmem:[#allocation3 + $0x84] sm:$0xf]
    %v89 = vld [vmem:[#allocation3 + $0x88] sm:$0xf]
    %v90 = vld [vmem:[#allocation3 + $0x8c] sm:$0xf]
    %v91 = vld [vmem:[#allocation3 + $0x90] sm:$0xf]
    %v92 = vld [vmem:[#allocation3 + $0x94] sm:$0xf]
    %v93 = vld [vmem:[#allocation3 + $0x98] sm:$0xf]
    %v94 = vld [vmem:[#allocation3 + $0x9c] sm:$0xf]
    %v95 = vld [vmem:[#allocation3 + $0xa0] sm:$0xf]
    %v96 = vld [vmem:[#allocation3 + $0xa4] sm:$0xf]
    %v97 = vld [vmem:[#allocation3 + $0xa8] sm:$0xf]
    %v98 = vld [vmem:[#allocation3 + $0xac] sm:$0xf]
    %v99 = vld [vmem:[#allocation3 + $0xb0] sm:$0xf]
    %v100 = vld [vmem:[#allocation3 + $0xb4] sm:$0xf]
    %v101 = vld [vmem:[#allocation3 + $0xb8] sm:$0xf]
    %v102 = vld [vmem:[#allocation3 + $0xbc] sm:$0xf]
    %v103 = vld [vmem:[#allocation3 + $0xc0] sm:$0xf]
    %v104 = vld [vmem:[#allocation3 + $0xc4] sm:$0xf]
    %v105 = vld [vmem:[#allocation3 + $0xc8] sm:$0xf]
    %v106 = vld [vmem:[#allocation3 + $0xcc] sm:$0xf]
    %v107 = vld [vmem:[#allocation3 + $0xd0] sm:$0xf]
    %v108 = vld [vmem:[#allocation3 + $0xd4] sm:$0xf]
    %v109 = vld [vmem:[#allocation3 + $0xd8] sm:$0xf]
    %v110 = vld [vmem:[#allocation3 + $0xdc] sm:$0xf]
    %v111 = vld [vmem:[#allocation3 + $0xe0] sm:$0xf]
    %v112 = vld [vmem:[#allocation3 + $0xe4] sm:$0xf]
    %v113 = vld [vmem:[#allocation3 + $0xe8] sm:$0xf]
    %v114 = vld [vmem:[#allocation3 + $0xec] sm:$0xf]
    %v115 = vld [vmem:[#allocation3 + $0xf0] sm:$0xf]
    %v116 = vld [vmem:[#allocation3 + $0xf4] sm:$0xf]
    %v117 = vld [vmem:[#allocation3 + $0xf8] sm:$0xf]
    %v118 = vld [vmem:[#allocation3 + $0xfc] sm:$0xf]
    %v119 = vld [vmem:[#allocation3 + $0x100] sm:$0xf]
    %v120 = vld [vmem:[#allocation3 + $0x104] sm:$0xf]
    %v121 = vld [vmem:[#allocation3 + $0x108] sm:$0xf]
    %v122 = vld [vmem:[#allocation3 + $0x10c] sm:$0xf]
    %v123 = vld [vmem:[#allocation3 + $0x110] sm:$0xf]
    %v124 = vld [vmem:[#allocation3 + $0x114] sm:$0xf]
    %v125 = vld [vmem:[#allocation3 + $0x118] sm:$0xf]
    %v126 = vld [vmem:[#allocation3 + $0x11c] sm:$0xf]
    %v127 = vld [vmem:[#allocation3 + $0x120] sm:$0xf]
    %v128 = vld [vmem:[#allocation3 + $0x124] sm:$0xf]
    %v129 = vld [vmem:[#allocation3 + $0x128] sm:$0xf]
    %v130 = vld [vmem:[#allocation3 + $0x12c] sm:$0xf]
    %v131 = vld [vmem:[#allocation3 + $0x130] sm:$0xf]
    %v132 = vld [vmem:[#allocation3 + $0x134] sm:$0xf]
    %v133 = vld [vmem:[#allocation3 + $0x138] sm:$0xf]
    %v134 = vld [vmem:[#allocation3 + $0x13c] sm:$0xf]
    %v135 = vld [vmem:[#allocation3 + $0x140] sm:$0xf]
    %v136 = vld [vmem:[#allocation3 + $0x144] sm:$0xf]
    %v137 = vld [vmem:[#allocation3 + $0x148] sm:$0xf]
    %v138 = vld [vmem:[#allocation3 + $0x14c] sm:$0xf]
    %v139 = vld [vmem:[#allocation3 + $0x150] sm:$0xf]
    %v140 = vld [vmem:[#allocation3 + $0x154] sm:$0xf]
    %v141 = vld [vmem:[#allocation3 + $0x158] sm:$0xf]
    %v142 = vld [vmem:[#allocation3 + $0x15c] sm:$0xf]
    %v143 = vld [vmem:[#allocation3 + $0x160] sm:$0xf]
    %v144 = vld [vmem:[#allocation3 + $0x164] sm:$0xf]
    %v145 = vld [vmem:[#allocation3 + $0x168] sm:$0xf]
    %v146 = vld [vmem:[#allocation3 + $0x16c] sm:$0xf]
    %v147 = vld [vmem:[#allocation3 + $0x170] sm:$0xf]
    %v148 = vld [vmem:[#allocation3 + $0x174] sm:$0xf]
    %v149 = vld [vmem:[#allocation3 + $0x178] sm:$0xf]
    %v150 = vld [vmem:[#allocation3 + $0x17c] sm:$0xf]
    %v151 = vld [vmem:[#allocation3 + $0x180] sm:$0xf]
    %v152 = vld [vmem:[#allocation3 + $0x184] sm:$0xf]
    %v153 = vld [vmem:[#allocation3 + $0x188] sm:$0xf]
    %v154 = vld [vmem:[#allocation3 + $0x18c] sm:$0xf]
    %v155 = vld [vmem:[#allocation3 + $0x190] sm:$0xf]
    %v156 = vld [vmem:[#allocation3 + $0x194] sm:$0xf]
    %v157 = vld [vmem:[#allocation3 + $0x198] sm:$0xf]
    %v158 = vld [vmem:[#allocation3 + $0x19c] sm:$0xf]
    %v159 = vld [vmem:[#allocation3 + $0x1a0] sm:$0xf]
    %v160 = vld [vmem:[#allocation3 + $0x1a4] sm:$0xf]
    %v161 = vld [vmem:[#allocation3 + $0x1a8] sm:$0xf]
    %v162 = vld [vmem:[#allocation3 + $0x1ac] sm:$0xf]
    %v163 = vld [vmem:[#allocation3 + $0x1b0] sm:$0xf]
    %v164 = vld [vmem:[#allocation3 + $0x1b4] sm:$0xf]
    %v165 = vld [vmem:[#allocation3 + $0x1b8] sm:$0xf]
    %v166 = vld [vmem:[#allocation3 + $0x1bc] sm:$0xf]
    %v167 = vld [vmem:[#allocation3 + $0x1c0] sm:$0xf]
    %v168 = vld [vmem:[#allocation3 + $0x1c4] sm:$0xf]
    %v169 = vld [vmem:[#allocation3 + $0x1c8] sm:$0xf]
    %v170 = vld [vmem:[#allocation3 + $0x1cc] sm:$0xf]
    %v171 = vld [vmem:[#allocation3 + $0x1d0] sm:$0xf]
    %v172 = vld [vmem:[#allocation3 + $0x1d4] sm:$0xf]
    %v173 = vld [vmem:[#allocation3 + $0x1d8] sm:$0xf]
    %v174 = vld [vmem:[#allocation3 + $0x1dc] sm:$0xf]
    %v175 = vld [vmem:[#allocation3 + $0x1e0] sm:$0xf]
    %v176 = vld [vmem:[#allocation3 + $0x1e4] sm:$0xf]
    %v177 = vld [vmem:[#allocation3 + $0x1e8] sm:$0xf]
    %v178 = vld [vmem:[#allocation3 + $0x1ec] sm:$0xf]
    %v179 = vld [vmem:[#allocation3 + $0x1f0] sm:$0xf]
    %v180 = vld [vmem:[#allocation3 + $0x1f4] sm:$0xf]
    %v181 = vld [vmem:[#allocation3 + $0x1f8] sm:$0xf]
    %v182 = vld [vmem:[#allocation3 + $0x1fc] sm:$0xf]
    %v311 = vunpack.c.l.b16 %v55
    %v312 = vunpack.c.l.b16 %v56
    %v313 = vunpack.c.l.b16 %v57
    %v314 = vunpack.c.l.b16 %v58
    %v315 = vunpack.c.l.b16 %v59
    %v316 = vunpack.c.l.b16 %v60
    %v317 = vunpack.c.l.b16 %v61
    %v318 = vunpack.c.l.b16 %v62
    %v319 = vunpack.c.l.b16 %v63
    %v320 = vunpack.c.l.b16 %v64
    %v321 = vunpack.c.l.b16 %v65
    %v322 = vunpack.c.l.b16 %v66
    %v323 = vunpack.c.l.b16 %v67
    %v324 = vunpack.c.l.b16 %v68
    %v325 = vunpack.c.l.b16 %v69
    %v326 = vunpack.c.l.b16 %v70
    %v327 = vunpack.c.l.b16 %v71
    %v328 = vunpack.c.l.b16 %v72
    %v329 = vunpack.c.l.b16 %v73
    %v330 = vunpack.c.l.b16 %v74
    %v331 = vunpack.c.l.b16 %v75
    %v332 = vunpack.c.l.b16 %v76
    %v333 = vunpack.c.l.b16 %v77
    %v334 = vunpack.c.l.b16 %v78
    %v335 = vunpack.c.l.b16 %v79
    %v336 = vunpack.c.l.b16 %v80
    %v337 = vunpack.c.l.b16 %v81
    %v338 = vunpack.c.l.b16 %v82
    %v339 = vunpack.c.l.b16 %v83
    %v340 = vunpack.c.l.b16 %v84
    %v341 = vunpack.c.l.b16 %v85
    %v342 = vunpack.c.l.b16 %v86
    %v343 = vunpack.c.l.b16 %v87
    %v344 = vunpack.c.l.b16 %v88
    %v345 = vunpack.c.l.b16 %v89
    %v346 = vunpack.c.l.b16 %v90
    %v347 = vunpack.c.l.b16 %v91
    %v348 = vunpack.c.l.b16 %v92
    %v349 = vunpack.c.l.b16 %v93
    %v350 = vunpack.c.l.b16 %v94
    %v351 = vunpack.c.l.b16 %v95
    %v352 = vunpack.c.l.b16 %v96
    %v353 = vunpack.c.l.b16 %v97
    %v354 = vunpack.c.l.b16 %v98
    %v355 = vunpack.c.l.b16 %v99
    %v356 = vunpack.c.l.b16 %v100
    %v357 = vunpack.c.l.b16 %v101
    %v358 = vunpack.c.l.b16 %v102
    %v359 = vunpack.c.l.b16 %v103
    %v360 = vunpack.c.l.b16 %v104
    %v361 = vunpack.c.l.b16 %v105
    %v362 = vunpack.c.l.b16 %v106
    %v363 = vunpack.c.l.b16 %v107
    %v364 = vunpack.c.l.b16 %v108
    %v365 = vunpack.c.l.b16 %v109
    %v366 = vunpack.c.l.b16 %v110
    %v367 = vunpack.c.l.b16 %v111
    %v368 = vunpack.c.l.b16 %v112
    %v369 = vunpack.c.l.b16 %v113
    %v370 = vunpack.c.l.b16 %v114
    %v371 = vunpack.c.l.b16 %v115
    %v372 = vunpack.c.l.b16 %v116
    %v373 = vunpack.c.l.b16 %v117
    %v374 = vunpack.c.l.b16 %v118
    %v375 = vunpack.c.l.b16 %v119
    %v376 = vunpack.c.l.b16 %v120
    %v377 = vunpack.c.l.b16 %v121
    %v378 = vunpack.c.l.b16 %v122
    %v379 = vunpack.c.l.b16 %v123
    %v380 = vunpack.c.l.b16 %v124
    %v381 = vunpack.c.l.b16 %v125
    %v382 = vunpack.c.l.b16 %v126
    %v383 = vunpack.c.l.b16 %v127
    %v384 = vunpack.c.l.b16 %v128
    %v385 = vunpack.c.l.b16 %v129
    %v386 = vunpack.c.l.b16 %v130
    %v387 = vunpack.c.l.b16 %v131
    %v388 = vunpack.c.l.b16 %v132
    %v389 = vunpack.c.l.b16 %v133
    %v390 = vunpack.c.l.b16 %v134
    %v391 = vunpack.c.l.b16 %v135
    %v392 = vunpack.c.l.b16 %v136
    %v393 = vunpack.c.l.b16 %v137
    %v394 = vunpack.c.l.b16 %v138
    %v395 = vunpack.c.l.b16 %v139
    %v396 = vunpack.c.l.b16 %v140
    %v397 = vunpack.c.l.b16 %v141
    %v398 = vunpack.c.l.b16 %v142
    %v399 = vunpack.c.l.b16 %v143
    %v400 = vunpack.c.l.b16 %v144
    %v401 = vunpack.c.l.b16 %v145
    %v402 = vunpack.c.l.b16 %v146
    %v403 = vunpack.c.l.b16 %v147
    %v404 = vunpack.c.l.b16 %v148
    %v405 = vunpack.c.l.b16 %v149
    %v406 = vunpack.c.l.b16 %v150
    %v407 = vunpack.c.l.b16 %v151
    %v408 = vunpack.c.l.b16 %v152
    %v409 = vunpack.c.l.b16 %v153
    %v410 = vunpack.c.l.b16 %v154
    %v411 = vunpack.c.l.b16 %v155
    %v412 = vunpack.c.l.b16 %v156
    %v413 = vunpack.c.l.b16 %v157
    %v414 = vunpack.c.l.b16 %v158
    %v415 = vunpack.c.l.b16 %v159
    %v416 = vunpack.c.l.b16 %v160
    %v417 = vunpack.c.l.b16 %v161
    %v418 = vunpack.c.l.b16 %v162
    %v419 = vunpack.c.l.b16 %v163
    %v420 = vunpack.c.l.b16 %v164
    %v421 = vunpack.c.l.b16 %v165
    %v422 = vunpack.c.l.b16 %v166
    %v423 = vunpack.c.l.b16 %v167
    %v424 = vunpack.c.l.b16 %v168
    %v425 = vunpack.c.l.b16 %v169
    %v426 = vunpack.c.l.b16 %v170
    %v427 = vunpack.c.l.b16 %v171
    %v428 = vunpack.c.l.b16 %v172
    %v429 = vunpack.c.l.b16 %v173
    %v430 = vunpack.c.l.b16 %v174
    %v431 = vunpack.c.l.b16 %v175
    %v432 = vunpack.c.l.b16 %v176
    %v433 = vunpack.c.l.b16 %v177
    %v434 = vunpack.c.l.b16 %v178
    %v435 = vunpack.c.l.b16 %v179
    %v436 = vunpack.c.l.b16 %v180
    %v437 = vunpack.c.l.b16 %v181
    %v438 = vunpack.c.l.b16 %v182
    %v439 = vpack.c.b16 %v312, %v311
    %v440 = vpack.c.b16 %v314, %v313
    %v441 = vpack.c.b16 %v316, %v315
    %v442 = vpack.c.b16 %v318, %v317
    %v443 = vpack.c.b16 %v320, %v319
    %v444 = vpack.c.b16 %v322, %v321
    %v445 = vpack.c.b16 %v324, %v323
    %v446 = vpack.c.b16 %v326, %v325
    %v447 = vpack.c.b16 %v328, %v327
    %v448 = vpack.c.b16 %v330, %v329
    %v449 = vpack.c.b16 %v332, %v331
    %v450 = vpack.c.b16 %v334, %v333
    %v451 = vpack.c.b16 %v336, %v335
    %v452 = vpack.c.b16 %v338, %v337
    %v453 = vpack.c.b16 %v340, %v339
    %v454 = vpack.c.b16 %v342, %v341
    %v455 = vpack.c.b16 %v344, %v343
    %v456 = vpack.c.b16 %v346, %v345
    %v457 = vpack.c.b16 %v348, %v347
    %v458 = vpack.c.b16 %v350, %v349
    %v459 = vpack.c.b16 %v352, %v351
    %v460 = vpack.c.b16 %v354, %v353
    %v461 = vpack.c.b16 %v356, %v355
    %v462 = vpack.c.b16 %v358, %v357
    %v463 = vpack.c.b16 %v360, %v359
    %v464 = vpack.c.b16 %v362, %v361
    %v465 = vpack.c.b16 %v364, %v363
    %v466 = vpack.c.b16 %v366, %v365
    %v467 = vpack.c.b16 %v368, %v367
    %v468 = vpack.c.b16 %v370, %v369
    %v469 = vpack.c.b16 %v372, %v371
    %v470 = vpack.c.b16 %v374, %v373
    %v471 = vpack.c.b16 %v376, %v375
    %v472 = vpack.c.b16 %v378, %v377
    %v473 = vpack.c.b16 %v380, %v379
    %v474 = vpack.c.b16 %v382, %v381
    %v475 = vpack.c.b16 %v384, %v383
    %v476 = vpack.c.b16 %v386, %v385
    %v477 = vpack.c.b16 %v388, %v387
    %v478 = vpack.c.b16 %v390, %v389
    %v479 = vpack.c.b16 %v392, %v391
    %v480 = vpack.c.b16 %v394, %v393
    %v481 = vpack.c.b16 %v396, %v395
    %v482 = vpack.c.b16 %v398, %v397
    %v483 = vpack.c.b16 %v400, %v399
    %v484 = vpack.c.b16 %v402, %v401
    %v485 = vpack.c.b16 %v404, %v403
    %v486 = vpack.c.b16 %v406, %v405
    %v487 = vpack.c.b16 %v408, %v407
    %v488 = vpack.c.b16 %v410, %v409
    %v489 = vpack.c.b16 %v412, %v411
    %v490 = vpack.c.b16 %v414, %v413
    %v491 = vpack.c.b16 %v416, %v415
    %v492 = vpack.c.b16 %v418, %v417
    %v493 = vpack.c.b16 %v420, %v419
    %v494 = vpack.c.b16 %v422, %v421
    %v495 = vpack.c.b16 %v424, %v423
    %v496 = vpack.c.b16 %v426, %v425
    %v497 = vpack.c.b16 %v428, %v427
    %v498 = vpack.c.b16 %v430, %v429
    %v499 = vpack.c.b16 %v432, %v431
    %v500 = vpack.c.b16 %v434, %v433
    %v501 = vpack.c.b16 %v436, %v435
    %v502 = vpack.c.b16 %v438, %v437
    %567 = vmatprep.subr.bf16.mxu0 0
    %568 = vmatpush1.bf16.msra.mxu0 %v446
    %569 = vmatprep.subr.bf16.mxu0 0
    %570 = vmatpush1.bf16.msra.mxu0 %v445
    %571 = vmatprep.subr.bf16.mxu0 0
    %572 = vmatpush1.bf16.msra.mxu0 %v444
    %573 = vmatprep.subr.bf16.mxu0 0
    %574 = vmatpush1.bf16.msra.mxu0 %v443
    %575 = vmatprep.subr.bf16.mxu0 0
    %576 = vmatpush1.bf16.msra.mxu0 %v442
    %577 = vmatprep.subr.bf16.mxu0 0
    %578 = vmatpush1.bf16.msra.mxu0 %v441
    %579 = vmatprep.subr.bf16.mxu0 0
    %580 = vmatpush1.bf16.msra.mxu0 %v440
    %581 = vmatprep.subr.bf16.mxu0 0
    %582 = vmatpush1.bf16.msra.mxu0 %v439
    %583 = vmatprep.subr.bf16.mxu0 0
    %584 = vmatpush2.bf16.msra.mxu0 %v454
    %585 = vmatprep.subr.bf16.mxu0 0
    %586 = vmatpush2.bf16.msra.mxu0 %v453
    %587 = vmatprep.subr.bf16.mxu0 0
    %588 = vmatpush2.bf16.msra.mxu0 %v452
    %589 = vmatprep.subr.bf16.mxu0 0
    %590 = vmatpush2.bf16.msra.mxu0 %v451
    %591 = vmatprep.subr.bf16.mxu0 0
    %592 = vmatpush2.bf16.msra.mxu0 %v450
    %593 = vmatprep.subr.bf16.mxu0 0
    %594 = vmatpush2.bf16.msra.mxu0 %v449
    %595 = vmatprep.subr.bf16.mxu0 0
    %596 = vmatpush2.bf16.msra.mxu0 %v448
    %597 = vmatprep.subr.bf16.mxu0 0
    %598 = vmatpush2.bf16.msra.mxu0 %v447
    %599 = vmatprep.mubr.bf16.mxu0 %v48
    %600 = vmatmul.mubr.bf16.gmra.mxu0 %v47
    %v601 = vpop.f32.mrf.mxu0
    %v602 = vadd.f32 0.0, %v601
    %v603 = vpop.f32.mrf.mxu0
    %v604 = vpop.f32.mrf.mxu0
    %v605 = vpop.f32.mrf.mxu0
    %606 = vdwg.mxu0
    %607 = vmatprep.subr.bf16.mxu0 0
    %608 = vmatpush1.bf16.msra.mxu0 %v462
    %609 = vmatprep.subr.bf16.mxu0 0
    %610 = vmatpush1.bf16.msra.mxu0 %v461
    %611 = vmatprep.subr.bf16.mxu0 0
    %612 = vmatpush1.bf16.msra.mxu0 %v460
    %613 = vmatprep.subr.bf16.mxu0 0
    %614 = vmatpush1.bf16.msra.mxu0 %v459
    %615 = vmatprep.subr.bf16.mxu0 0
    %616 = vmatpush1.bf16.msra.mxu0 %v458
    %617 = vmatprep.subr.bf16.mxu0 0
    %618 = vmatpush1.bf16.msra.mxu0 %v457
    %619 = vmatprep.subr.bf16.mxu0 0
    %620 = vmatpush1.bf16.msra.mxu0 %v456
    %621 = vmatprep.subr.bf16.mxu0 0
    %622 = vmatpush1.bf16.msra.mxu0 %v455
    %623 = vmatprep.subr.bf16.mxu0 0
    %624 = vmatpush2.bf16.msra.mxu0 %v470
    %625 = vmatprep.subr.bf16.mxu0 0
    %626 = vmatpush2.bf16.msra.mxu0 %v469
    %627 = vmatprep.subr.bf16.mxu0 0
    %628 = vmatpush2.bf16.msra.mxu0 %v468
    %629 = vmatprep.subr.bf16.mxu0 0
    %630 = vmatpush2.bf16.msra.mxu0 %v467
    %631 = vmatprep.subr.bf16.mxu0 0
    %632 = vmatpush2.bf16.msra.mxu0 %v466
    %633 = vmatprep.subr.bf16.mxu0 0
    %634 = vmatpush2.bf16.msra.mxu0 %v465
    %635 = vmatprep.subr.bf16.mxu0 0
    %636 = vmatpush2.bf16.msra.mxu0 %v464
    %637 = vmatprep.subr.bf16.mxu0 0
    %638 = vmatpush2.bf16.msra.mxu0 %v463
    %639 = vmatprep.mubr.bf16.mxu0 %v50
    %640 = vmatmul.mubr.bf16.gmra.mxu0 %v49
    %v641 = vpop.f32.mrf.mxu0
    %v642 = vadd.f32 %v602, %v641
    %v643 = vpop.f32.mrf.mxu0
    %v644 = vpop.f32.mrf.mxu0
    %v645 = vpop.f32.mrf.mxu0
    %646 = vdwg.mxu0
    %647 = vmatprep.subr.bf16.mxu0 0
    %648 = vmatpush1.bf16.msra.mxu0 %v478
    %649 = vmatprep.subr.bf16.mxu0 0
    %650 = vmatpush1.bf16.msra.mxu0 %v477
    %651 = vmatprep.subr.bf16.mxu0 0
    %652 = vmatpush1.bf16.msra.mxu0 %v476
    %653 = vmatprep.subr.bf16.mxu0 0
    %654 = vmatpush1.bf16.msra.mxu0 %v475
    %655 = vmatprep.subr.bf16.mxu0 0
    %656 = vmatpush1.bf16.msra.mxu0 %v474
    %657 = vmatprep.subr.bf16.mxu0 0
    %658 = vmatpush1.bf16.msra.mxu0 %v473
    %659 = vmatprep.subr.bf16.mxu0 0
    %660 = vmatpush1.bf16.msra.mxu0 %v472
    %661 = vmatprep.subr.bf16.mxu0 0
    %662 = vmatpush1.bf16.msra.mxu0 %v471
    %663 = vmatprep.subr.bf16.mxu0 0
    %664 = vmatpush2.bf16.msra.mxu0 %v486
    %665 = vmatprep.subr.bf16.mxu0 0
    %666 = vmatpush2.bf16.msra.mxu0 %v485
    %667 = vmatprep.subr.bf16.mxu0 0
    %668 = vmatpush2.bf16.msra.mxu0 %v484
    %669 = vmatprep.subr.bf16.mxu0 0
    %670 = vmatpush2.bf16.msra.mxu0 %v483
    %671 = vmatprep.subr.bf16.mxu0 0
    %672 = vmatpush2.bf16.msra.mxu0 %v482
    %673 = vmatprep.subr.bf16.mxu0 0
    %674 = vmatpush2.bf16.msra.mxu0 %v481
    %675 = vmatprep.subr.bf16.mxu0 0
    %676 = vmatpush2.bf16.msra.mxu0 %v480
    %677 = vmatprep.subr.bf16.mxu0 0
    %678 = vmatpush2.bf16.msra.mxu0 %v479
    %679 = vmatprep.mubr.bf16.mxu0 %v52
    %680 = vmatmul.mubr.bf16.gmra.mxu0 %v51
    %v681 = vpop.f32.mrf.mxu0
    %v682 = vadd.f32 %v642, %v681
    %v683 = vpop.f32.mrf.mxu0
    %v684 = vpop.f32.mrf.mxu0
    %v685 = vpop.f32.mrf.mxu0
    %686 = vdwg.mxu0
    %687 = vmatprep.subr.bf16.mxu0 0
    %688 = vmatpush1.bf16.msra.mxu0 %v494
    %689 = vmatprep.subr.bf16.mxu0 0
    %690 = vmatpush1.bf16.msra.mxu0 %v493
    %691 = vmatprep.subr.bf16.mxu0 0
    %692 = vmatpush1.bf16.msra.mxu0 %v492
    %693 = vmatprep.subr.bf16.mxu0 0
    %694 = vmatpush1.bf16.msra.mxu0 %v491
    %695 = vmatprep.subr.bf16.mxu0 0
    %696 = vmatpush1.bf16.msra.mxu0 %v490
    %697 = vmatprep.subr.bf16.mxu0 0
    %698 = vmatpush1.bf16.msra.mxu0 %v489
    %699 = vmatprep.subr.bf16.mxu0 0
    %700 = vmatpush1.bf16.msra.mxu0 %v488
    %701 = vmatprep.subr.bf16.mxu0 0
    %702 = vmatpush1.bf16.msra.mxu0 %v487
    %703 = vmatprep.subr.bf16.mxu0 0
    %704 = vmatpush2.bf16.msra.mxu0 %v502
    %705 = vmatprep.subr.bf16.mxu0 0
    %706 = vmatpush2.bf16.msra.mxu0 %v501
    %707 = vmatprep.subr.bf16.mxu0 0
    %708 = vmatpush2.bf16.msra.mxu0 %v500
    %709 = vmatprep.subr.bf16.mxu0 0
    %710 = vmatpush2.bf16.msra.mxu0 %v499
    %711 = vmatprep.subr.bf16.mxu0 0
    %712 = vmatpush2.bf16.msra.mxu0 %v498
    %713 = vmatprep.subr.bf16.mxu0 0
    %714 = vmatpush2.bf16.msra.mxu0 %v497
    %715 = vmatprep.subr.bf16.mxu0 0
    %716 = vmatpush2.bf16.msra.mxu0 %v496
    %717 = vmatprep.subr.bf16.mxu0 0
    %718 = vmatpush2.bf16.msra.mxu0 %v495
    %719 = vmatprep.mubr.bf16.mxu0 %v54
    %720 = vmatmul.mubr.bf16.gmra.mxu0 %v53
    %v721 = vpop.f32.mrf.mxu0
    %v722 = vadd.f32 %v682, %v721
    %v723 = vpop.f32.mrf.mxu0
    %v724 = vpop.f32.mrf.mxu0
    %v725 = vpop.f32.mrf.mxu0
    %726 = vdwg.mxu0
    %v727 = vadd.f32 %v38, %v722
    %728 = vst [vmem:[#allocation2] sm:$0xff] %v727
    // Predicated region
    $region22: #{_classifier_forward.1} parent=1 // pred_check
      %p729 = pneg %p33
    $region23: #{_classifier_forward.1} parent=1 // pred_check_branch
      %731 = sbr.rel (%p729) target = $region25
    $region24: #{_classifier_forward.1} parent=1 // pred_region
      %v732 = vld [vmem:[#allocation2] sm:$0xff]
      %v733 = vld [vmem:[%s2] sm:$0x1]
      %v735 = vlaneseq
      %v736 = vshrl.u32 %v735, 7
      %v737 = vsub.s32 0, %v736
      %v738 = vrot.slane %v733, %v737
      %v740 = vadd.f32 %v732, %v738
      %741 = vst [vmem:[%s3] sm:$0xff] %v740
      %742 = vmax.xlane.f32.xlu0 %v740
      %v743 = vpop.xlane.xlu0 %742
      %v744 = vsub.f32 %v740, %v743
      %v745 = vmul.f32 %v744, 1.442695
      %v746 = vpow.pop %v745
      %747 = vadd.xlane.f32.xlu0 %v746
      %v748 = vpop.xlane.xlu0 %747
      %v749 = vlog2.pop %v748
      %v750 = vmul.f32 %v749, 0.6931472
      %v751 = vsub.f32 %v744, %v750
      %v752 = vmul.f32 %v751, 1.442695
      %v753 = vpow.pop %v752
      %754 = vst [vmem:[%s4] sm:$0xff] %v753
      %v755 = vmul.f32 %v753, %v751
      %756 = vadd.xlane.f32.xlu0 %v755
      %v757 = vpop.xlane.xlu0 %756
      %v758 = vsub.f32 0.0, %v757
      %v759 = vsub.f32 0.0, %v753
      %v760 = vadd.f32 %v751, %v758
      %v761 = vmul.f32 %v759, %v760
      %v762 = vpack.c.bf16 %v761, %v761
      %763 = vst [vmem:[%s5] sm:$0xf] %v762
      %764 = vst [vmem:[%s6] sm:$0xff] %v758
    $region25: #{_classifier_forward.1} parent=1 // pred_fallthru
      _
    // Predicated region
    $region26: #{_classifier_forward.1} parent=1 // pred_check
      _
    $region27: #{_classifier_forward.1} parent=1 // pred_check_branch
      %766 = sbr.rel (0) target = $region29
    $region28: #{_classifier_forward.1} parent=1 // pred_region
      _
    $region29: #{_classifier_forward.1} parent=1 // pred_fallthru
      _
    // Predicated region
    $region30: #{_classifier_forward.1} parent=1 // pred_check
      _
    $region31: #{_classifier_forward.1} parent=1 // pred_check_branch
      %768 = sbr.rel (0) target = $region33
    $region32: #{_classifier_forward.1} parent=1 // pred_region
      _
    $region33: #{_classifier_forward.1} parent=1 // pred_fallthru
      _
    // Predicated region
    $region34: #{_classifier_forward.1} parent=1 // pred_check
      _
    $region35: #{_classifier_forward.1} parent=1 // pred_check_branch
      %770 = sbr.rel (0) target = $region37
    $region36: #{_classifier_forward.1} parent=1 // pred_region
      _
    $region37: #{_classifier_forward.1} parent=1 // pred_fallthru
      _
    // Predicated region
    $region38: #{_classifier_forward.1} parent=1 // pred_check
      _
    $region39: #{_classifier_forward.1} parent=1 // pred_check_branch
      %772 = sbr.rel (0) target = $region41
    $region40: #{_classifier_forward.1} parent=1 // pred_region
      _
    $region41: #{_classifier_forward.1} parent=1 // pred_fallthru
      _
    // Predicated region
    $region42: #{_classifier_forward.1} parent=1 // pred_check
      _
    $region43: #{_classifier_forward.1} parent=1 // pred_check_branch
      %774 = sbr.rel (0) target = $region45
    $region44: #{_classifier_forward.1} parent=1 // pred_region
      _
    $region45: #{_classifier_forward.1} parent=1 // pred_fallthru
      _
    // Predicated region
    $region46: #{_classifier_forward.1} parent=1 // pred_check
      _
    $region47: #{_classifier_forward.1} parent=1 // pred_check_branch
      %776 = sbr.rel (0) target = $region49
    $region48: #{_classifier_forward.1} parent=1 // pred_region
      _
    $region49: #{_classifier_forward.1} parent=1 // pred_fallthru
      _
    // Predicated region
    $region50: #{_classifier_forward.1} parent=1 // pred_check
      _
    $region51: #{_classifier_forward.1} parent=1 // pred_check_branch
      %778 = sbr.rel (0) target = $region53
    $region52: #{_classifier_forward.1} parent=1 // pred_region
      _
    $region53: #{_classifier_forward.1} parent=1 // pred_fallthru
      _
    // Predicated region
    $region54: #{_classifier_forward.1} parent=1 // pred_check
      _
    $region55: #{_classifier_forward.1} parent=1 // pred_check_branch
      %780 = sbr.rel (0) target = $region57
    $region56: #{_classifier_forward.1} parent=1 // pred_region
      _
    $region57: #{_classifier_forward.1} parent=1 // pred_fallthru
      _
    %781 = vsyncpa [#allocation4], 1

</llo_original>
